<compile_context>
chip_gen: v6e
topology: v6e:2x2x1
jax: 0.10.0
libtpu: 0.0.40
codegen_flags: <defaults>
</compile_context>

<pallas_src>
import functools

import jax
import jax.numpy as jnp
from jax.experimental import pallas as pl
from jax.experimental.pallas import tpu as pltpu


# Finite "minus infinity": 0 * _NEG_FILL == 0 (no NaNs on the one-hot path) and
# exp(_NEG_FILL - m) underflows to exactly 0 in the fused cross entropy.
_NEG_FILL = -1e30

# Flip to benchmark the one-hot @ table MXU lookup against the sublane gather.
# At Vp = 128 the MXU is otherwise idle while the VALU/XLU are what the CE
# needs, so the one-hot path can win; pick by measurement for your vocab size.
PREFER_ONEHOT_LOOKUP = False

# Only request a single buffer for the VMEM-resident table once it is big
# enough for the saved buffer to matter (double-buffering a constant-index
# block is pure waste, but at 64 KiB the saving is irrelevant).
_SINGLE_BUFFER_TABLE_BYTES = 1 << 20


def _round_up(x, m):
    return (x + m - 1) // m * m


@functools.lru_cache(maxsize=None)
def _vmem_capacity_bytes():
    """Physical VMEM of this generation (64 MiB fallback = v7x, safe everywhere)."""
    try:
        return int(pltpu.get_tpu_info().vmem_capacity_bytes)
    except Exception:
        return 64 << 20


def _lookup_rows(emb_ref, idx, *, use_gather):
    """logits[n, :] = emb[idx[n], :] from a VMEM-resident (Vp, Vp) table.

    idx: (R, 1) int32.  Indices must be in [0, vocab) (nn.Embedding semantics).
    """
    R = idx.shape[0]
    Vp = emb_ref.shape[-1]
    if use_gather:
        gather_idx = jnp.broadcast_to(idx, (R, Vp))
        return jnp.take_along_axis(emb_ref[...], gather_idx, axis=0,
                                   mode="promise_in_bounds")
    # One-hot @ table on the (otherwise idle) MXU.
    col = jax.lax.broadcasted_iota(jnp.int32, (R, Vp), 1)
    one_hot = (col == idx).astype(emb_ref.dtype)
    return jnp.dot(one_hot, emb_ref[...], preferred_element_type=jnp.float32)


@functools.lru_cache(maxsize=None)
def _gather_lookup_supported():
    """One-time cached probe: can this Mosaic build lower the axis-0 dynamic
    gather used for the embedding lookup?  Compile-only (AOT), never re-run."""
    def probe_kernel(idx_ref, emb_ref, out_ref):
        out_ref[...] = _lookup_rows(emb_ref, idx_ref[...], use_gather=True)

    probe = pl.pallas_call(
        probe_kernel,
        out_shape=jax.ShapeDtypeStruct((8, 128), jnp.float32),
    )
    try:
        jax.jit(probe).lower(jnp.zeros((8, 1), jnp.int32),
                             jnp.zeros((128, 128), jnp.float32)).compile()
        return True
    except Exception:
        return False


def _bigram_kernel(idx_ref, tgt_ref, emb_ref, logits_ref, loss_ref, *,
                   n_valid, use_gather):
    """One grid step: embedding lookup for R rows + fused cross entropy.

    Outputs:
      logits_ref: (R, Vp) float32, lane-dense store.
      loss_ref:   (1, 1, 128) float32 -- this tile's summed (masked) CE,
                  splat across 128 lanes so the store is a full unmasked vst.
    """
    R, Vp = logits_ref.shape

    idx = idx_ref[...]                                       # (R, 1) int32
    tgt = tgt_ref[...]                                       # (R, 1) int32
    col = jax.lax.broadcasted_iota(jnp.int32, (R, Vp), 1)    # (R, Vp)

    logits = _lookup_rows(emb_ref, idx, use_gather=use_gather)   # (R, Vp) f32
    logits_ref[...] = logits

    # Fused cross entropy.  Padded vocab columns hold _NEG_FILL -> exp() == 0,
    # so the logsumexp only sees the real vocab.
    m = jnp.max(logits, axis=-1, keepdims=True)                              # (R, 1)
    lse = m + jnp.log(jnp.sum(jnp.exp(logits - m), axis=-1, keepdims=True))  # (R, 1)
    tgt_logit = jnp.sum(jnp.where(col == tgt, logits, 0.0),
                        axis=-1, keepdims=True)                              # (R, 1)

    # Mask padding rows of the N = B*T axis, reduce to one scalar per tile.
    row = pl.program_id(0) * R + jax.lax.broadcasted_iota(jnp.int32, (R, 1), 0)
    row_loss = jnp.where(row < n_valid, lse - tgt_logit, 0.0)                # (R, 1)
    tile_loss = jnp.sum(row_loss, axis=0, keepdims=True)                     # (1, 1)
    loss_ref[...] = jnp.broadcast_to(tile_loss.reshape(1, 1, 1), loss_ref.shape)


def _choose_row_tile(n_rows, vpad, vmem_budget):
    """Rows of the N = B*T axis handled per grid step (static, trace-time)."""
    table_bytes = vpad * vpad * 4
    n8 = _round_up(max(n_rows, 8), 8)
    # Footprint if the whole N axis is one block (the pipeline still allocates
    # two buffers per streamed operand, so count the streamed tiles twice).
    one_block_bytes = 2 * table_bytes + 2 * n8 * (vpad + 2) * 4 + (1 << 20)
    if n8 <= 1024 and one_block_bytes <= vmem_budget // 2:
        return n8                 # grid=(1,): zero per-step pipeline overhead
    # Streaming regime: 512-row tiles amortize the ~0.35us/step pipeline cost
    # (85%+ of HBM roofline vs ~29% at 128) and keep v5e's single vector-store
    # slot fed with full-width stores.  On v7x an even tile count keeps both
    # TensorCores busy through the tail.
    return 512


def _bigram_pallas_call(idx_pad, tgt_pad, emb_pad, *, n_valid, row_tile,
                        use_gather):
    n_pad = idx_pad.shape[0]
    vpad = emb_pad.shape[0]
    num_tiles = n_pad // row_tile
    table_bytes = vpad * vpad * 4

    kernel = functools.partial(_bigram_kernel, n_valid=n_valid,
                               use_gather=use_gather)

    # Constant-index table block: VMEM resident for the whole grid.  Once it
    # is big enough to matter, request a single buffer (double-buffering a
    # block whose index_map is constant is pure VMEM waste).
    table_spec_kwargs = {}
    table_buffers = 2
    if table_bytes >= _SINGLE_BUFFER_TABLE_BYTES:
        table_spec_kwargs["pipeline_mode"] = pl.Buffered(1)
        table_buffers = 1
    table_spec = pl.BlockSpec((vpad, vpad), lambda i: (0, 0), **table_spec_kwargs)

    # VMEM budget: resident table + double-buffered idx/target/logits/loss
    # tiles + headroom, clamped to 3/4 of this generation's physical VMEM
    # (v7x has only 64 MiB; v5e/v6e have 128 MiB).
    tile_bytes = row_tile * (vpad + 2) * 4 + 128 * 4
    needed = table_buffers * table_bytes + 2 * tile_bytes + (2 << 20)
    vmem_limit = min(max(needed, 8 << 20), (_vmem_capacity_bytes() * 3) // 4)

    return pl.pallas_call(
        kernel,
        grid=(num_tiles,),
        in_specs=[
            pl.BlockSpec((row_tile, 1), lambda i: (i, 0)),     # idx tile
            pl.BlockSpec((row_tile, 1), lambda i: (i, 0)),     # targets tile
            table_spec,                                        # resident table
        ],
        out_specs=(
            pl.BlockSpec((row_tile, vpad), lambda i: (i, 0)),  # logits tile
            pl.BlockSpec((1, 1, 128), lambda i: (i, 0, 0)),    # per-tile loss sum
        ),
        out_shape=(
            jax.ShapeDtypeStruct((n_pad, vpad), jnp.float32),
            jax.ShapeDtypeStruct((num_tiles, 1, 128), jnp.float32),
        ),
        compiler_params=pltpu.CompilerParams(
            dimension_semantics=("parallel",),   # independent N tiles -> both v7x TCs
            vmem_limit_bytes=int(vmem_limit),
        ),
    )(idx_pad, tgt_pad, emb_pad)


@functools.partial(jax.jit, static_argnames=("with_loss", "use_gather"))
def _bigram_forward_jit(idx, targets, emb_table, *, with_loss, use_gather):
    """Padding + pallas_call + epilogue fused under one jit (one dispatch)."""
    B, T = idx.shape
    V = emb_table.shape[0]
    N = B * T
    Vp = _round_up(V, 128)

    row_tile = _choose_row_tile(N, Vp, (_vmem_capacity_bytes() * 3) // 4)
    Np = _round_up(N, row_tile)

    idx_pad = jnp.pad(idx.reshape(N, 1).astype(jnp.int32), ((0, Np - N), (0, 0)))
    tgt_pad = jnp.pad(targets.reshape(N, 1).astype(jnp.int32), ((0, Np - N), (0, 0)))
    # Padded table lives inside the jit so XLA fuses it; for large, reused
    # vocab tables pad once outside the training step instead.
    emb_pad = jnp.pad(emb_table.astype(jnp.float32),
                      ((0, Vp - V), (0, Vp - V)), constant_values=_NEG_FILL)

    logits_pad, loss_parts = _bigram_pallas_call(
        idx_pad, tgt_pad, emb_pad, n_valid=N, row_tile=row_tile,
        use_gather=use_gather)

    logits = logits_pad[:N, :V]
    if not with_loss:
        return logits.reshape(B, T, V), jnp.zeros((), jnp.float32)
    loss = jnp.sum(loss_parts[:, 0, 0]) / N
    return logits, loss


def bigram_forward(idx, targets, emb_table):
    """Mirrors BigramLanguageModel.forward.

    idx: (B, T) int tokens; targets: (B, T) int or None; emb_table: (V, V) f32.
      targets given -> (logits (B*T, V) float32, scalar mean CE loss)
      targets None  -> (logits (B, T, V) float32, None)
    """
    use_gather = (not PREFER_ONEHOT_LOOKUP) and _gather_lookup_supported()
    if targets is None:
        # TODO(synk): generate() (autoregressive torch.multinomial sampling)
        # remains a host-side loop around this forward; not a kernel.
        logits, _ = _bigram_forward_jit(idx, jnp.zeros_like(idx), emb_table,
                                        with_loss=False, use_gather=use_gather)
        return logits, None
    return _bigram_forward_jit(idx, targets, emb_table,
                               with_loss=True, use_gather=use_gather)


def bigram_forward_ref(idx, targets, emb_table):
    """Pure-JAX reference mirroring the PyTorch forward (targets given)."""
    B, T = idx.shape
    V = emb_table.shape[0]
    logits = emb_table[idx].reshape(B * T, V)
    tgt = targets.reshape(B * T)
    lse = jax.scipy.special.logsumexp(logits, axis=-1)
    tgt_logit = jnp.take_along_axis(logits, tgt[:, None], axis=-1)[:, 0]
    loss = jnp.mean(lse - tgt_logit)
    return logits, loss


if __name__ == "__main__":
    # Shapes matching workshop/train.py: batch=32, block_size=8, char vocab=65.
    # V=65 also exercises the 128-lane vocab padding / masking path.
    B, T, V = 32, 8, 65

    key = jax.random.PRNGKey(0)
    k_emb, k_idx, k_tgt = jax.random.split(key, 3)

    emb_table = jax.random.normal(k_emb, (V, V), dtype=jnp.float32)  # ~ nn.Embedding init
    idx = jax.random.randint(k_idx, (B, T), 0, V, dtype=jnp.int32)
    targets = jax.random.randint(k_tgt, (B, T), 0, V, dtype=jnp.int32)

    logits, loss = bigram_forward(idx, targets, emb_table)
    logits, loss = jax.block_until_ready((logits, loss))

    logits_ref, loss_ref = bigram_forward_ref(idx, targets, emb_table)
    assert logits.shape == (B * T, V)
    assert jnp.allclose(logits, logits_ref, atol=1e-5, rtol=1e-5)
    assert jnp.allclose(loss, loss_ref, atol=1e-5, rtol=1e-5)

    # targets=None path (used by generate()): logits stay (B, T, V), loss is None.
    logits_nl, loss_nl = bigram_forward(idx, None, emb_table)
    jax.block_until_ready(logits_nl)
    assert loss_nl is None and logits_nl.shape == (B, T, V)
    assert jnp.allclose(logits_nl.reshape(B * T, V), logits_ref, atol=1e-5, rtol=1e-5)

    print("KERNEL_OK")
</pallas_src>

<mosaic_0001>
module attributes {stable_mosaic.version = 11 : i64} {
  func.func @_bigram_kernel(%arg0: i32, %arg1: memref<256x1xi32, #tpu.memory_space<vmem>>, %arg2: memref<256x1xi32, #tpu.memory_space<vmem>>, %arg3: memref<128x128xf32, #tpu.memory_space<vmem>>, %arg4: memref<256x128xf32, #tpu.memory_space<vmem>>, %arg5: memref<1x1x128xf32, #tpu.memory_space<vmem>>) attributes {dimension_semantics = [#tpu.dimension_semantics<parallel>], iteration_bounds = array<i64: 1>, scalar_prefetch = 0 : i64, scratch_operands = 0 : i64, tpu.core_type = #tpu.core_type<tc>, window_params = [{transform_indices = @transform_0, window_bounds = array<i64: 256, 1>}, {transform_indices = @transform_1, window_bounds = array<i64: 256, 1>}, {pipeline_mode = #tpu.pipeline_mode<synchronous>, transform_indices = @transform_2, window_bounds = array<i64: 128, 128>}, {transform_indices = @transform_3, window_bounds = array<i64: 256, 128>}, {transform_indices = @transform_4, window_bounds = array<i64: 1, 1, 128>}]} {
    %c0 = arith.constant 0 : index
    %c0_0 = arith.constant 0 : index
    %0 = vector.load %arg1[%c0, %c0_0] : memref<256x1xi32, #tpu.memory_space<vmem>>, vector<256x1xi32>
    %c0_1 = arith.constant 0 : index
    %c0_2 = arith.constant 0 : index
    %1 = vector.load %arg2[%c0_1, %c0_2] : memref<256x1xi32, #tpu.memory_space<vmem>>, vector<256x1xi32>
    %2 = tpu.iota {dimensions = array<i32: 1>} : vector<256x128xi32>
    %3 = tpu.iota {dimensions = array<i32: 1>} : vector<256x128xi32>
    %4 = vector.broadcast %0 : vector<256x1xi32> to vector<256x128xi32>
    %5 = arith.cmpi eq, %3, %4 : vector<256x128xi32>
    %6 = arith.extui %5 : vector<256x128xi1> to vector<256x128xi32>
    %7 = arith.sitofp %6 : vector<256x128xi32> to vector<256x128xf32>
    %c0_3 = arith.constant 0 : index
    %c0_4 = arith.constant 0 : index
    %8 = vector.load %arg3[%c0_3, %c0_4] : memref<128x128xf32, #tpu.memory_space<vmem>>, vector<128x128xf32>
    %cst = arith.constant dense<0.000000e+00> : vector<256x128xf32>
    %9 = tpu.matmul %7, %8, %cst {dimension_numbers = #tpu.dot_dimension_numbers<[1], [0], [0], [1], [0, 0, 1, 1], [], []>} : vector<256x128xf32>, vector<128x128xf32>, vector<256x128xf32> -> vector<256x128xf32>
    %c0_5 = arith.constant 0 : index
    %c0_6 = arith.constant 0 : index
    %10 = vector.load %arg4[%c0_5, %c0_6] : memref<256x128xf32, #tpu.memory_space<vmem>>, vector<256x128xf32>
    tpu.vector_store %arg4[%c0_5, %c0_6], %9 {strides = array<i32>} : memref<256x128xf32, #tpu.memory_space<vmem>>, vector<256x128xf32>,
    %cst_7 = arith.constant dense<0xFF800000> : vector<256xf32>
    %11 = vector.multi_reduction <maximumf>, %9, %cst_7 [1] : vector<256x128xf32> to vector<256xf32>
    %12 = vector.shape_cast %11 : vector<256xf32> to vector<256x1xf32>
    %13 = vector.broadcast %12 : vector<256x1xf32> to vector<256x128xf32>
    %14 = arith.subf %9, %13 : vector<256x128xf32>
    %15 = math.exp %14 : vector<256x128xf32>
    %cst_8 = arith.constant dense<0.000000e+00> : vector<256xf32>
    %16 = vector.multi_reduction <add>, %15, %cst_8 [1] : vector<256x128xf32> to vector<256xf32>
    %17 = vector.shape_cast %16 : vector<256xf32> to vector<256x1xf32>
    %18 = math.log %17 : vector<256x1xf32>
    %19 = arith.addf %12, %18 : vector<256x1xf32>
    %20 = vector.broadcast %1 : vector<256x1xi32> to vector<256x128xi32>
    %21 = arith.cmpi eq, %2, %20 : vector<256x128xi32>
    %cst_9 = arith.constant 0.000000e+00 : f32
    %22 = vector.broadcast %cst_9 : f32 to vector<256x128xf32>
    %23 = arith.select %21, %9, %22 : vector<256x128xi1>, vector<256x128xf32>
    %cst_10 = arith.constant dense<0.000000e+00> : vector<256xf32>
    %24 = vector.multi_reduction <add>, %23, %cst_10 [1] : vector<256x128xf32> to vector<256xf32>
    %25 = vector.shape_cast %24 : vector<256xf32> to vector<256x1xf32>
    %c256_i32 = arith.constant 256 : i32
    %26 = arith.muli %arg0, %c256_i32 : i32
    %27 = tpu.iota {dimensions = array<i32: 0>} : vector<256x1xi32>
    %28 = vector.broadcast %26 : i32 to vector<256x1xi32>
    %29 = arith.addi %28, %27 : vector<256x1xi32>
    %c256_i32_11 = arith.constant 256 : i32
    %30 = vector.broadcast %c256_i32_11 : i32 to vector<256x1xi32>
    %31 = arith.cmpi slt, %29, %30 : vector<256x1xi32>
    %32 = arith.subf %19, %25 : vector<256x1xf32>
    %cst_12 = arith.constant 0.000000e+00 : f32
    %33 = vector.broadcast %cst_12 : f32 to vector<256x1xf32>
    %34 = arith.select %31, %32, %33 : vector<256x1xi1>, vector<256x1xf32>
    %cst_13 = arith.constant dense<0.000000e+00> : vector<1xf32>
    %35 = vector.multi_reduction <add>, %34, %cst_13 [0] : vector<256x1xf32> to vector<1xf32>
    %36 = vector.shape_cast %35 : vector<1xf32> to vector<1x1xf32>
    %37 = vector.shape_cast %36 : vector<1x1xf32> to vector<1x1x1xf32>
    %38 = vector.shape_cast %37 : vector<1x1x1xf32> to vector<1x1x1xf32>
    %39 = vector.broadcast %38 : vector<1x1x1xf32> to vector<1x1x128xf32>
    %c0_14 = arith.constant 0 : index
    %c0_15 = arith.constant 0 : index
    %c0_16 = arith.constant 0 : index
    %40 = vector.load %arg5[%c0_14, %c0_15, %c0_16] : memref<1x1x128xf32, #tpu.memory_space<vmem>>, vector<1x1x128xf32>
    tpu.vector_store %arg5[%c0_14, %c0_15, %c0_16], %39 {strides = array<i32>} : memref<1x1x128xf32, #tpu.memory_space<vmem>>, vector<1x1x128xf32>,
    return
  }
  func.func @transform_0(%arg0: i32) -> (i32, i32) {
    %c0_i32 = arith.constant 0 : i32
    %c0_i32_0 = arith.constant 0 : i32
    return %arg0, %c0_i32 : i32, i32
  }
  func.func @transform_1(%arg0: i32) -> (i32, i32) {
    %c0_i32 = arith.constant 0 : i32
    %c0_i32_0 = arith.constant 0 : i32
    return %arg0, %c0_i32 : i32, i32
  }
  func.func @transform_2(%arg0: i32) -> (i32, i32) {
    %c0_i32 = arith.constant 0 : i32
    %c0_i32_0 = arith.constant 0 : i32
    %c0_i32_1 = arith.constant 0 : i32
    return %c0_i32, %c0_i32_0 : i32, i32
  }
  func.func @transform_3(%arg0: i32) -> (i32, i32) {
    %c0_i32 = arith.constant 0 : i32
    %c0_i32_0 = arith.constant 0 : i32
    return %arg0, %c0_i32 : i32, i32
  }
  func.func @transform_4(%arg0: i32) -> (i32, i32, i32) {
    %c0_i32 = arith.constant 0 : i32
    %c0_i32_0 = arith.constant 0 : i32
    %c0_i32_1 = arith.constant 0 : i32
    return %arg0, %c0_i32, %c0_i32_0 : i32, i32, i32
  }
}

</mosaic_0001>

<llo_original>
// kernel: _bigram_forward_jit.1
$region0: #{_bigram_forward_jit.1}
  #allocation0 [shape = 'u32[]', space=smem, size = 0x4, offset = 0x4, fixed_abs, tag = 'smem constant byte address 0x4 - core index']
  #allocation1 [shape = 'u32[144,128]{1,0:T(1,128)}', space=vmem, size = 0x12000, scoped, tag = 'internal scratch']
  %s0 = inlined_call_operand.vmem [shape: s32[256,1], index: 0, kind: input, shape index: {}]
  %s1 = inlined_call_operand.vmem [shape: s32[256,1], index: 1, kind: input, shape index: {}]
  %s2 = inlined_call_operand.vmem [shape: f32[128,128], index: 2, kind: input, shape index: {}]
  %s3 = inlined_call_operand.vmem [shape: f32[256,128], index: 3, kind: output, shape index: {0}]
  %s4 = inlined_call_operand.vmem [shape: f32[1,1,128], index: 4, kind: output, shape index: {1}]
  %5 = xla_tuple %s3, %s4
  %s6 = sld [smem:[#allocation0]]
  $region30: #{_bigram_forward_jit.1} parent=0
    _
  %s8 = ssub.s32 1, %s6
  %s9 = scalar_select 0, %s8, %s6
  // Predicated region
  $region2: #{_bigram_forward_jit.1} parent=0 // pred_check
    _
  $region3: #{_bigram_forward_jit.1} parent=0 // pred_check_branch
    %11 = sbr.rel (0) target = $region5
  $region4: #{_bigram_forward_jit.1} parent=0 // pred_region
    _
  $region5: #{_bigram_forward_jit.1} parent=0 // pred_fallthru
    _
  // Predicated region
  $region6: #{_bigram_forward_jit.1} parent=0 // pred_check
    _
  $region7: #{_bigram_forward_jit.1} parent=0 // pred_check_branch
    %13 = sbr.rel (0) target = $region9
  $region8: #{_bigram_forward_jit.1} parent=0 // pred_region
    _
  $region9: #{_bigram_forward_jit.1} parent=0 // pred_fallthru
    _
  // Predicated region
  $region10: #{_bigram_forward_jit.1} parent=0 // pred_check
    _
  $region11: #{_bigram_forward_jit.1} parent=0 // pred_check_branch
    %15 = sbr.rel (0) target = $region13
  $region12: #{_bigram_forward_jit.1} parent=0 // pred_region
    _
  $region13: #{_bigram_forward_jit.1} parent=0 // pred_fallthru
    _
  %v16 = vld [vmem:[%s0] sm:$0xff]
  %v17 = vld [vmem:[%s0 + $0x8] sm:$0xff]
  %v18 = vld [vmem:[%s0 + $0x10] sm:$0xff]
  %v19 = vld [vmem:[%s0 + $0x18] sm:$0xff]
  %v20 = vld [vmem:[%s0 + $0x20] sm:$0xff]
  %v21 = vld [vmem:[%s0 + $0x28] sm:$0xff]
  %v22 = vld [vmem:[%s0 + $0x30] sm:$0xff]
  %v23 = vld [vmem:[%s0 + $0x38] sm:$0xff]
  %v24 = vld [vmem:[%s0 + $0x40] sm:$0xff]
  %v25 = vld [vmem:[%s0 + $0x48] sm:$0xff]
  %v26 = vld [vmem:[%s0 + $0x50] sm:$0xff]
  %v27 = vld [vmem:[%s0 + $0x58] sm:$0xff]
  %v28 = vld [vmem:[%s0 + $0x60] sm:$0xff]
  %v29 = vld [vmem:[%s0 + $0x68] sm:$0xff]
  %v30 = vld [vmem:[%s0 + $0x70] sm:$0xff]
  %v31 = vld [vmem:[%s0 + $0x78] sm:$0xff]
  %v32 = vld [vmem:[%s0 + $0x80] sm:$0xff]
  %v33 = vld [vmem:[%s0 + $0x88] sm:$0xff]
  %v34 = vld [vmem:[%s0 + $0x90] sm:$0xff]
  %v35 = vld [vmem:[%s0 + $0x98] sm:$0xff]
  %v36 = vld [vmem:[%s0 + $0xa0] sm:$0xff]
  %v37 = vld [vmem:[%s0 + $0xa8] sm:$0xff]
  %v38 = vld [vmem:[%s0 + $0xb0] sm:$0xff]
  %v39 = vld [vmem:[%s0 + $0xb8] sm:$0xff]
  %v40 = vld [vmem:[%s0 + $0xc0] sm:$0xff]
  %v41 = vld [vmem:[%s0 + $0xc8] sm:$0xff]
  %v42 = vld [vmem:[%s0 + $0xd0] sm:$0xff]
  %v43 = vld [vmem:[%s0 + $0xd8] sm:$0xff]
  %v44 = vld [vmem:[%s0 + $0xe0] sm:$0xff]
  %v45 = vld [vmem:[%s0 + $0xe8] sm:$0xff]
  %v46 = vld [vmem:[%s0 + $0xf0] sm:$0xff]
  %v47 = vld [vmem:[%s0 + $0xf8] sm:$0xff]
  %v48 = vld [vmem:[%s1] sm:$0xff]
  %v49 = vld [vmem:[%s1 + $0x8] sm:$0xff]
  %v50 = vld [vmem:[%s1 + $0x10] sm:$0xff]
  %v51 = vld [vmem:[%s1 + $0x18] sm:$0xff]
  %v52 = vld [vmem:[%s1 + $0x20] sm:$0xff]
  %v53 = vld [vmem:[%s1 + $0x28] sm:$0xff]
  %v54 = vld [vmem:[%s1 + $0x30] sm:$0xff]
  %v55 = vld [vmem:[%s1 + $0x38] sm:$0xff]
  %v56 = vld [vmem:[%s1 + $0x40] sm:$0xff]
  %v57 = vld [vmem:[%s1 + $0x48] sm:$0xff]
  %v58 = vld [vmem:[%s1 + $0x50] sm:$0xff]
  %v59 = vld [vmem:[%s1 + $0x58] sm:$0xff]
  %v60 = vld [vmem:[%s1 + $0x60] sm:$0xff]
  %v61 = vld [vmem:[%s1 + $0x68] sm:$0xff]
  %v62 = vld [vmem:[%s1 + $0x70] sm:$0xff]
  %v63 = vld [vmem:[%s1 + $0x78] sm:$0xff]
  %v64 = vld [vmem:[%s1 + $0x80] sm:$0xff]
  %v65 = vld [vmem:[%s1 + $0x88] sm:$0xff]
  %v66 = vld [vmem:[%s1 + $0x90] sm:$0xff]
  %v67 = vld [vmem:[%s1 + $0x98] sm:$0xff]
  %v68 = vld [vmem:[%s1 + $0xa0] sm:$0xff]
  %v69 = vld [vmem:[%s1 + $0xa8] sm:$0xff]
  %v70 = vld [vmem:[%s1 + $0xb0] sm:$0xff]
  %v71 = vld [vmem:[%s1 + $0xb8] sm:$0xff]
  %v72 = vld [vmem:[%s1 + $0xc0] sm:$0xff]
  %v73 = vld [vmem:[%s1 + $0xc8] sm:$0xff]
  %v74 = vld [vmem:[%s1 + $0xd0] sm:$0xff]
  %v75 = vld [vmem:[%s1 + $0xd8] sm:$0xff]
  %v76 = vld [vmem:[%s1 + $0xe0] sm:$0xff]
  %v77 = vld [vmem:[%s1 + $0xe8] sm:$0xff]
  %v78 = vld [vmem:[%s1 + $0xf0] sm:$0xff]
  %v79 = vld [vmem:[%s1 + $0xf8] sm:$0xff]
  %v80 = vlaneseq
  %v81 = vand.u32 %v80, 127
  %82 = vset.pattern.permute.xlu0 0
  %83 = vperm.xlu0 %82, %v16
  %v84 = vpop.permute.xlu0 %83
  %85 = vset.pattern.permute.xlu0 0
  %86 = vperm.xlu0 %85, %v17
  %v87 = vpop.permute.xlu0 %86
  %88 = vset.pattern.permute.xlu0 0
  %89 = vperm.xlu0 %88, %v18
  %v90 = vpop.permute.xlu0 %89
  %91 = vset.pattern.permute.xlu0 0
  %92 = vperm.xlu0 %91, %v19
  %v93 = vpop.permute.xlu0 %92
  %94 = vset.pattern.permute.xlu0 0
  %95 = vperm.xlu0 %94, %v20
  %v96 = vpop.permute.xlu0 %95
  %97 = vset.pattern.permute.xlu0 0
  %98 = vperm.xlu0 %97, %v21
  %v99 = vpop.permute.xlu0 %98
  %100 = vset.pattern.permute.xlu0 0
  %101 = vperm.xlu0 %100, %v22
  %v102 = vpop.permute.xlu0 %101
  %103 = vset.pattern.permute.xlu0 0
  %104 = vperm.xlu0 %103, %v23
  %v105 = vpop.permute.xlu0 %104
  %106 = vset.pattern.permute.xlu0 0
  %107 = vperm.xlu0 %106, %v24
  %v108 = vpop.permute.xlu0 %107
  %109 = vset.pattern.permute.xlu0 0
  %110 = vperm.xlu0 %109, %v25
  %v111 = vpop.permute.xlu0 %110
  %112 = vset.pattern.permute.xlu0 0
  %113 = vperm.xlu0 %112, %v26
  %v114 = vpop.permute.xlu0 %113
  %115 = vset.pattern.permute.xlu0 0
  %116 = vperm.xlu0 %115, %v27
  %v117 = vpop.permute.xlu0 %116
  %118 = vset.pattern.permute.xlu0 0
  %119 = vperm.xlu0 %118, %v28
  %v120 = vpop.permute.xlu0 %119
  %121 = vset.pattern.permute.xlu0 0
  %122 = vperm.xlu0 %121, %v29
  %v123 = vpop.permute.xlu0 %122
  %124 = vset.pattern.permute.xlu0 0
  %125 = vperm.xlu0 %124, %v30
  %v126 = vpop.permute.xlu0 %125
  %127 = vset.pattern.permute.xlu0 0
  %128 = vperm.xlu0 %127, %v31
  %v129 = vpop.permute.xlu0 %128
  %130 = vset.pattern.permute.xlu0 0
  %131 = vperm.xlu0 %130, %v32
  %v132 = vpop.permute.xlu0 %131
  %133 = vset.pattern.permute.xlu0 0
  %134 = vperm.xlu0 %133, %v33
  %v135 = vpop.permute.xlu0 %134
  %136 = vset.pattern.permute.xlu0 0
  %137 = vperm.xlu0 %136, %v34
  %v138 = vpop.permute.xlu0 %137
  %139 = vset.pattern.permute.xlu0 0
  %140 = vperm.xlu0 %139, %v35
  %v141 = vpop.permute.xlu0 %140
  %142 = vset.pattern.permute.xlu0 0
  %143 = vperm.xlu0 %142, %v36
  %v144 = vpop.permute.xlu0 %143
  %145 = vset.pattern.permute.xlu0 0
  %146 = vperm.xlu0 %145, %v37
  %v147 = vpop.permute.xlu0 %146
  %148 = vset.pattern.permute.xlu0 0
  %149 = vperm.xlu0 %148, %v38
  %v150 = vpop.permute.xlu0 %149
  %151 = vset.pattern.permute.xlu0 0
  %152 = vperm.xlu0 %151, %v39
  %v153 = vpop.permute.xlu0 %152
  %154 = vset.pattern.permute.xlu0 0
  %155 = vperm.xlu0 %154, %v40
  %v156 = vpop.permute.xlu0 %155
  %157 = vset.pattern.permute.xlu0 0
  %158 = vperm.xlu0 %157, %v41
  %v159 = vpop.permute.xlu0 %158
  %160 = vset.pattern.permute.xlu0 0
  %161 = vperm.xlu0 %160, %v42
  %v162 = vpop.permute.xlu0 %161
  %163 = vset.pattern.permute.xlu0 0
  %164 = vperm.xlu0 %163, %v43
  %v165 = vpop.permute.xlu0 %164
  %166 = vset.pattern.permute.xlu0 0
  %167 = vperm.xlu0 %166, %v44
  %v168 = vpop.permute.xlu0 %167
  %169 = vset.pattern.permute.xlu0 0
  %170 = vperm.xlu0 %169, %v45
  %v171 = vpop.permute.xlu0 %170
  %172 = vset.pattern.permute.xlu0 0
  %173 = vperm.xlu0 %172, %v46
  %v174 = vpop.permute.xlu0 %173
  %175 = vset.pattern.permute.xlu0 0
  %176 = vperm.xlu0 %175, %v47
  %v177 = vpop.permute.xlu0 %176
  %vm178 = vcmp.eq.s32.totalorder %v81, %v84
  %vm179 = vcmp.eq.s32.totalorder %v81, %v87
  %vm180 = vcmp.eq.s32.totalorder %v81, %v90
  %vm181 = vcmp.eq.s32.totalorder %v81, %v93
  %vm182 = vcmp.eq.s32.totalorder %v81, %v96
  %vm183 = vcmp.eq.s32.totalorder %v81, %v99
  %vm184 = vcmp.eq.s32.totalorder %v81, %v102
  %vm185 = vcmp.eq.s32.totalorder %v81, %v105
  %vm186 = vcmp.eq.s32.totalorder %v81, %v108
  %vm187 = vcmp.eq.s32.totalorder %v81, %v111
  %vm188 = vcmp.eq.s32.totalorder %v81, %v114
  %vm189 = vcmp.eq.s32.totalorder %v81, %v117
  %vm190 = vcmp.eq.s32.totalorder %v81, %v120
  %vm191 = vcmp.eq.s32.totalorder %v81, %v123
  %vm192 = vcmp.eq.s32.totalorder %v81, %v126
  %vm193 = vcmp.eq.s32.totalorder %v81, %v129
  %vm194 = vcmp.eq.s32.totalorder %v81, %v132
  %vm195 = vcmp.eq.s32.totalorder %v81, %v135
  %vm196 = vcmp.eq.s32.totalorder %v81, %v138
  %vm197 = vcmp.eq.s32.totalorder %v81, %v141
  %vm198 = vcmp.eq.s32.totalorder %v81, %v144
  %vm199 = vcmp.eq.s32.totalorder %v81, %v147
  %vm200 = vcmp.eq.s32.totalorder %v81, %v150
  %vm201 = vcmp.eq.s32.totalorder %v81, %v153
  %vm202 = vcmp.eq.s32.totalorder %v81, %v156
  %vm203 = vcmp.eq.s32.totalorder %v81, %v159
  %vm204 = vcmp.eq.s32.totalorder %v81, %v162
  %vm205 = vcmp.eq.s32.totalorder %v81, %v165
  %vm206 = vcmp.eq.s32.totalorder %v81, %v168
  %vm207 = vcmp.eq.s32.totalorder %v81, %v171
  %vm208 = vcmp.eq.s32.totalorder %v81, %v174
  %vm209 = vcmp.eq.s32.totalorder %v81, %v177
  %v210 = vsel %vm178, 1, 0
  %v211 = vsel %vm179, 1, 0
  %v212 = vsel %vm180, 1, 0
  %v213 = vsel %vm181, 1, 0
  %v214 = vsel %vm182, 1, 0
  %v215 = vsel %vm183, 1, 0
  %v216 = vsel %vm184, 1, 0
  %v217 = vsel %vm185, 1, 0
  %v218 = vsel %vm186, 1, 0
  %v219 = vsel %vm187, 1, 0
  %v220 = vsel %vm188, 1, 0
  %v221 = vsel %vm189, 1, 0
  %v222 = vsel %vm190, 1, 0
  %v223 = vsel %vm191, 1, 0
  %v224 = vsel %vm192, 1, 0
  %v225 = vsel %vm193, 1, 0
  %v226 = vsel %vm194, 1, 0
  %v227 = vsel %vm195, 1, 0
  %v228 = vsel %vm196, 1, 0
  %v229 = vsel %vm197, 1, 0
  %v230 = vsel %vm198, 1, 0
  %v231 = vsel %vm199, 1, 0
  %v232 = vsel %vm200, 1, 0
  %v233 = vsel %vm201, 1, 0
  %v234 = vsel %vm202, 1, 0
  %v235 = vsel %vm203, 1, 0
  %v236 = vsel %vm204, 1, 0
  %v237 = vsel %vm205, 1, 0
  %v238 = vsel %vm206, 1, 0
  %v239 = vsel %vm207, 1, 0
  %v240 = vsel %vm208, 1, 0
  %v241 = vsel %vm209, 1, 0
  %v242 = vcvt.s32.f32 %v210
  %v243 = vcvt.s32.f32 %v211
  %v244 = vcvt.s32.f32 %v212
  %v245 = vcvt.s32.f32 %v213
  %v246 = vcvt.s32.f32 %v214
  %v247 = vcvt.s32.f32 %v215
  %v248 = vcvt.s32.f32 %v216
  %v249 = vcvt.s32.f32 %v217
  %v250 = vcvt.s32.f32 %v218
  %v251 = vcvt.s32.f32 %v219
  %v252 = vcvt.s32.f32 %v220
  %v253 = vcvt.s32.f32 %v221
  %v254 = vcvt.s32.f32 %v222
  %v255 = vcvt.s32.f32 %v223
  %v256 = vcvt.s32.f32 %v224
  %v257 = vcvt.s32.f32 %v225
  %v258 = vcvt.s32.f32 %v226
  %v259 = vcvt.s32.f32 %v227
  %v260 = vcvt.s32.f32 %v228
  %v261 = vcvt.s32.f32 %v229
  %v262 = vcvt.s32.f32 %v230
  %v263 = vcvt.s32.f32 %v231
  %v264 = vcvt.s32.f32 %v232
  %v265 = vcvt.s32.f32 %v233
  %v266 = vcvt.s32.f32 %v234
  %v267 = vcvt.s32.f32 %v235
  %v268 = vcvt.s32.f32 %v236
  %v269 = vcvt.s32.f32 %v237
  %v270 = vcvt.s32.f32 %v238
  %v271 = vcvt.s32.f32 %v239
  %v272 = vcvt.s32.f32 %v240
  %v273 = vcvt.s32.f32 %v241
  %v274 = vld [vmem:[%s2] sm:$0xff]
  %v275 = vld [vmem:[%s2 + $0x8] sm:$0xff]
  %v276 = vld [vmem:[%s2 + $0x10] sm:$0xff]
  %v277 = vld [vmem:[%s2 + $0x18] sm:$0xff]
  %v278 = vld [vmem:[%s2 + $0x20] sm:$0xff]
  %v279 = vld [vmem:[%s2 + $0x28] sm:$0xff]
  %v280 = vld [vmem:[%s2 + $0x30] sm:$0xff]
  %v281 = vld [vmem:[%s2 + $0x38] sm:$0xff]
  %v282 = vld [vmem:[%s2 + $0x40] sm:$0xff]
  %v283 = vld [vmem:[%s2 + $0x48] sm:$0xff]
  %v284 = vld [vmem:[%s2 + $0x50] sm:$0xff]
  %v285 = vld [vmem:[%s2 + $0x58] sm:$0xff]
  %v286 = vld [vmem:[%s2 + $0x60] sm:$0xff]
  %v287 = vld [vmem:[%s2 + $0x68] sm:$0xff]
  %v288 = vld [vmem:[%s2 + $0x70] sm:$0xff]
  %v289 = vld [vmem:[%s2 + $0x78] sm:$0xff]
  %290 = vmatprep.subr.mxu0 0.0
  %291 = vmatpush1.msra.mxu0 %v289
  %292 = vmatprep.subr.mxu0 0.0
  %293 = vmatpush1.msra.mxu0 %v288
  %294 = vmatprep.subr.mxu0 0.0
  %295 = vmatpush1.msra.mxu0 %v287
  %296 = vmatprep.subr.mxu0 0.0
  %297 = vmatpush1.msra.mxu0 %v286
  %298 = vmatprep.subr.mxu0 0.0
  %299 = vmatpush1.msra.mxu0 %v285
  %300 = vmatprep.subr.mxu0 0.0
  %301 = vmatpush1.msra.mxu0 %v284
  %302 = vmatprep.subr.mxu0 0.0
  %303 = vmatpush1.msra.mxu0 %v283
  %304 = vmatprep.subr.mxu0 0.0
  %305 = vmatpush1.msra.mxu0 %v282
  %306 = vmatprep.subr.mxu0 0.0
  %307 = vmatpush1.msra.mxu0 %v281
  %308 = vmatprep.subr.mxu0 0.0
  %309 = vmatpush1.msra.mxu0 %v280
  %310 = vmatprep.subr.mxu0 0.0
  %311 = vmatpush1.msra.mxu0 %v279
  %312 = vmatprep.subr.mxu0 0.0
  %313 = vmatpush1.msra.mxu0 %v278
  %314 = vmatprep.subr.mxu0 0.0
  %315 = vmatpush1.msra.mxu0 %v277
  %316 = vmatprep.subr.mxu0 0.0
  %317 = vmatpush1.msra.mxu0 %v276
  %318 = vmatprep.subr.mxu0 0.0
  %319 = vmatpush1.msra.mxu0 %v275
  %320 = vmatprep.subr.mxu0 0.0
  %321 = vmatpush1.msra.mxu0 %v274
  %322 = vmatprep.subr.mxu0 0.0
  %323 = vmatpush2.msra.mxu0 0.0
  %324 = vmatprep.subr.mxu0 0.0
  %325 = vmatpush2.msra.mxu0 0.0
  %326 = vmatprep.subr.mxu0 0.0
  %327 = vmatpush2.msra.mxu0 0.0
  %328 = vmatprep.subr.mxu0 0.0
  %329 = vmatpush2.msra.mxu0 0.0
  %330 = vmatprep.subr.mxu0 0.0
  %331 = vmatpush2.msra.mxu0 0.0
  %332 = vmatprep.subr.mxu0 0.0
  %333 = vmatpush2.msra.mxu0 0.0
  %334 = vmatprep.subr.mxu0 0.0
  %335 = vmatpush2.msra.mxu0 0.0
  %336 = vmatprep.subr.mxu0 0.0
  %337 = vmatpush2.msra.mxu0 0.0
  %338 = vmatprep.subr.mxu0 0.0
  %339 = vmatpush2.msra.mxu0 0.0
  %340 = vmatprep.subr.mxu0 0.0
  %341 = vmatpush2.msra.mxu0 0.0
  %342 = vmatprep.subr.mxu0 0.0
  %343 = vmatpush2.msra.mxu0 0.0
  %344 = vmatprep.subr.mxu0 0.0
  %345 = vmatpush2.msra.mxu0 0.0
  %346 = vmatprep.subr.mxu0 0.0
  %347 = vmatpush2.msra.mxu0 0.0
  %348 = vmatprep.subr.mxu0 0.0
  %349 = vmatpush2.msra.mxu0 0.0
  %350 = vmatprep.subr.mxu0 0.0
  %351 = vmatpush2.msra.mxu0 0.0
  %352 = vmatprep.subr.mxu0 0.0
  %353 = vmatpush2.msra.mxu0 0.0
  %354 = vmatprep.mubr.f32.mxu0 0.0
  %355 = vmatmul.mubr.f32.gmra.mxu0 %v242
  %v356 = vpop.f32.mrf.mxu0
  %v357 = vadd.f32 0.0, %v356
  %v358 = vpop.f32.mrf.mxu0
  %359 = vmatprep.mubr.f32.mxu0 0.0
  %360 = vmatmul.mubr.f32.gmra.mxu0 %v243
  %v361 = vpop.f32.mrf.mxu0
  %v362 = vadd.f32 0.0, %v361
  %v363 = vpop.f32.mrf.mxu0
  %364 = vmatprep.mubr.f32.mxu0 0.0
  %365 = vmatmul.mubr.f32.gmra.mxu0 %v244
  %v366 = vpop.f32.mrf.mxu0
  %v367 = vadd.f32 0.0, %v366
  %v368 = vpop.f32.mrf.mxu0
  %369 = vmatprep.mubr.f32.mxu0 0.0
  %370 = vmatmul.mubr.f32.gmra.mxu0 %v245
  %v371 = vpop.f32.mrf.mxu0
  %v372 = vadd.f32 0.0, %v371
  %v373 = vpop.f32.mrf.mxu0
  %374 = vmatprep.mubr.f32.mxu0 0.0
  %375 = vmatmul.mubr.f32.gmra.mxu0 %v246
  %v376 = vpop.f32.mrf.mxu0
  %v377 = vadd.f32 0.0, %v376
  %v378 = vpop.f32.mrf.mxu0
  %379 = vmatprep.mubr.f32.mxu0 0.0
  %380 = vmatmul.mubr.f32.gmra.mxu0 %v247
  %v381 = vpop.f32.mrf.mxu0
  %v382 = vadd.f32 0.0, %v381
  %v383 = vpop.f32.mrf.mxu0
  %384 = vmatprep.mubr.f32.mxu0 0.0
  %385 = vmatmul.mubr.f32.gmra.mxu0 %v248
  %v386 = vpop.f32.mrf.mxu0
  %v387 = vadd.f32 0.0, %v386
  %v388 = vpop.f32.mrf.mxu0
  %389 = vmatprep.mubr.f32.mxu0 0.0
  %390 = vmatmul.mubr.f32.gmra.mxu0 %v249
  %v391 = vpop.f32.mrf.mxu0
  %v392 = vadd.f32 0.0, %v391
  %v393 = vpop.f32.mrf.mxu0
  %394 = vmatprep.mubr.f32.mxu0 0.0
  %395 = vmatmul.mubr.f32.gmra.mxu0 %v250
  %v396 = vpop.f32.mrf.mxu0
  %v397 = vadd.f32 0.0, %v396
  %v398 = vpop.f32.mrf.mxu0
  %399 = vmatprep.mubr.f32.mxu0 0.0
  %400 = vmatmul.mubr.f32.gmra.mxu0 %v251
  %v401 = vpop.f32.mrf.mxu0
  %v402 = vadd.f32 0.0, %v401
  %v403 = vpop.f32.mrf.mxu0
  %404 = vmatprep.mubr.f32.mxu0 0.0
  %405 = vmatmul.mubr.f32.gmra.mxu0 %v252
  %v406 = vpop.f32.mrf.mxu0
  %v407 = vadd.f32 0.0, %v406
  %v408 = vpop.f32.mrf.mxu0
  %409 = vmatprep.mubr.f32.mxu0 0.0
  %410 = vmatmul.mubr.f32.gmra.mxu0 %v253
  %v411 = vpop.f32.mrf.mxu0
  %v412 = vadd.f32 0.0, %v411
  %v413 = vpop.f32.mrf.mxu0
  %414 = vmatprep.mubr.f32.mxu0 0.0
  %415 = vmatmul.mubr.f32.gmra.mxu0 %v254
  %v416 = vpop.f32.mrf.mxu0
  %v417 = vadd.f32 0.0, %v416
  %v418 = vpop.f32.mrf.mxu0
  %419 = vmatprep.mubr.f32.mxu0 0.0
  %420 = vmatmul.mubr.f32.gmra.mxu0 %v255
  %v421 = vpop.f32.mrf.mxu0
  %v422 = vadd.f32 0.0, %v421
  %v423 = vpop.f32.mrf.mxu0
  %424 = vmatprep.mubr.f32.mxu0 0.0
  %425 = vmatmul.mubr.f32.gmra.mxu0 %v256
  %v426 = vpop.f32.mrf.mxu0
  %v427 = vadd.f32 0.0, %v426
  %v428 = vpop.f32.mrf.mxu0
  %429 = vmatprep.mubr.f32.mxu0 0.0
  %430 = vmatmul.mubr.f32.gmra.mxu0 %v257
  %v431 = vpop.f32.mrf.mxu0
  %v432 = vadd.f32 0.0, %v431
  %v433 = vpop.f32.mrf.mxu0
  %434 = vmatprep.mubr.f32.mxu0 0.0
  %435 = vmatmul.mubr.f32.gmra.mxu0 %v258
  %v436 = vpop.f32.mrf.mxu0
  %v437 = vadd.f32 0.0, %v436
  %v438 = vpop.f32.mrf.mxu0
  %439 = vmatprep.mubr.f32.mxu0 0.0
  %440 = vmatmul.mubr.f32.gmra.mxu0 %v259
  %v441 = vpop.f32.mrf.mxu0
  %v442 = vadd.f32 0.0, %v441
  %v443 = vpop.f32.mrf.mxu0
  %444 = vmatprep.mubr.f32.mxu0 0.0
  %445 = vmatmul.mubr.f32.gmra.mxu0 %v260
  %v446 = vpop.f32.mrf.mxu0
  %v447 = vadd.f32 0.0, %v446
  %v448 = vpop.f32.mrf.mxu0
  %449 = vmatprep.mubr.f32.mxu0 0.0
  %450 = vmatmul.mubr.f32.gmra.mxu0 %v261
  %v451 = vpop.f32.mrf.mxu0
  %v452 = vadd.f32 0.0, %v451
  %v453 = vpop.f32.mrf.mxu0
  %454 = vmatprep.mubr.f32.mxu0 0.0
  %455 = vmatmul.mubr.f32.gmra.mxu0 %v262
  %v456 = vpop.f32.mrf.mxu0
  %v457 = vadd.f32 0.0, %v456
  %v458 = vpop.f32.mrf.mxu0
  %459 = vmatprep.mubr.f32.mxu0 0.0
  %460 = vmatmul.mubr.f32.gmra.mxu0 %v263
  %v461 = vpop.f32.mrf.mxu0
  %v462 = vadd.f32 0.0, %v461
  %v463 = vpop.f32.mrf.mxu0
  %464 = vmatprep.mubr.f32.mxu0 0.0
  %465 = vmatmul.mubr.f32.gmra.mxu0 %v264
  %v466 = vpop.f32.mrf.mxu0
  %v467 = vadd.f32 0.0, %v466
  %v468 = vpop.f32.mrf.mxu0
  %469 = vmatprep.mubr.f32.mxu0 0.0
  %470 = vmatmul.mubr.f32.gmra.mxu0 %v265
  %v471 = vpop.f32.mrf.mxu0
  %v472 = vadd.f32 0.0, %v471
  %v473 = vpop.f32.mrf.mxu0
  %474 = vmatprep.mubr.f32.mxu0 0.0
  %475 = vmatmul.mubr.f32.gmra.mxu0 %v266
  %v476 = vpop.f32.mrf.mxu0
  %v477 = vadd.f32 0.0, %v476
  %v478 = vpop.f32.mrf.mxu0
  %479 = vmatprep.mubr.f32.mxu0 0.0
  %480 = vmatmul.mubr.f32.gmra.mxu0 %v267
  %v481 = vpop.f32.mrf.mxu0
  %v482 = vadd.f32 0.0, %v481
  %v483 = vpop.f32.mrf.mxu0
  %484 = vmatprep.mubr.f32.mxu0 0.0
  %485 = vmatmul.mubr.f32.gmra.mxu0 %v268
  %v486 = vpop.f32.mrf.mxu0
  %v487 = vadd.f32 0.0, %v486
  %v488 = vpop.f32.mrf.mxu0
  %489 = vmatprep.mubr.f32.mxu0 0.0
  %490 = vmatmul.mubr.f32.gmra.mxu0 %v269
  %v491 = vpop.f32.mrf.mxu0
  %v492 = vadd.f32 0.0, %v491
  %v493 = vpop.f32.mrf.mxu0
  %494 = vmatprep.mubr.f32.mxu0 0.0
  %495 = vmatmul.mubr.f32.gmra.mxu0 %v270
  %v496 = vpop.f32.mrf.mxu0
  %v497 = vadd.f32 0.0, %v496
  %v498 = vpop.f32.mrf.mxu0
  %499 = vmatprep.mubr.f32.mxu0 0.0
  %500 = vmatmul.mubr.f32.gmra.mxu0 %v271
  %v501 = vpop.f32.mrf.mxu0
  %v502 = vadd.f32 0.0, %v501
  %v503 = vpop.f32.mrf.mxu0
  %504 = vmatprep.mubr.f32.mxu0 0.0
  %505 = vmatmul.mubr.f32.gmra.mxu0 %v272
  %v506 = vpop.f32.mrf.mxu0
  %v507 = vadd.f32 0.0, %v506
  %v508 = vpop.f32.mrf.mxu0
  %509 = vmatprep.mubr.f32.mxu0 0.0
  %510 = vmatmul.mubr.f32.gmra.mxu0 %v273
  %v511 = vpop.f32.mrf.mxu0
  %v512 = vadd.f32 0.0, %v511
  %v513 = vpop.f32.mrf.mxu0
  %514 = vdwg.mxu0
  %515 = vst [vmem:[%s3] sm:$0xff] %v357
  %516 = vst [vmem:[%s3 + $0x8] sm:$0xff] %v362
  %517 = vst [vmem:[%s3 + $0x10] sm:$0xff] %v367
  %518 = vst [vmem:[%s3 + $0x18] sm:$0xff] %v372
  %519 = vst [vmem:[%s3 + $0x20] sm:$0xff] %v377
  %520 = vst [vmem:[%s3 + $0x28] sm:$0xff] %v382
  %521 = vst [vmem:[%s3 + $0x30] sm:$0xff] %v387
  %522 = vst [vmem:[%s3 + $0x38] sm:$0xff] %v392
  %523 = vst [vmem:[%s3 + $0x40] sm:$0xff] %v397
  %524 = vst [vmem:[%s3 + $0x48] sm:$0xff] %v402
  %525 = vst [vmem:[%s3 + $0x50] sm:$0xff] %v407
  %526 = vst [vmem:[%s3 + $0x58] sm:$0xff] %v412
  %527 = vst [vmem:[%s3 + $0x60] sm:$0xff] %v417
  %528 = vst [vmem:[%s3 + $0x68] sm:$0xff] %v422
  %529 = vst [vmem:[%s3 + $0x70] sm:$0xff] %v427
  %530 = vst [vmem:[%s3 + $0x78] sm:$0xff] %v432
  %531 = vst [vmem:[%s3 + $0x80] sm:$0xff] %v437
  %532 = vst [vmem:[%s3 + $0x88] sm:$0xff] %v442
  %533 = vst [vmem:[%s3 + $0x90] sm:$0xff] %v447
  %534 = vst [vmem:[%s3 + $0x98] sm:$0xff] %v452
  %535 = vst [vmem:[%s3 + $0xa0] sm:$0xff] %v457
  %536 = vst [vmem:[%s3 + $0xa8] sm:$0xff] %v462
  %537 = vst [vmem:[%s3 + $0xb0] sm:$0xff] %v467
  %538 = vst [vmem:[%s3 + $0xb8] sm:$0xff] %v472
  %539 = vst [vmem:[%s3 + $0xc0] sm:$0xff] %v477
  %540 = vst [vmem:[%s3 + $0xc8] sm:$0xff] %v482
  %541 = vst [vmem:[%s3 + $0xd0] sm:$0xff] %v487
  %542 = vst [vmem:[%s3 + $0xd8] sm:$0xff] %v492
  %543 = vst [vmem:[%s3 + $0xe0] sm:$0xff] %v497
  %544 = vst [vmem:[%s3 + $0xe8] sm:$0xff] %v502
  %545 = vst [vmem:[%s3 + $0xf0] sm:$0xff] %v507
  %546 = vst [vmem:[%s3 + $0xf8] sm:$0xff] %v512
  %547 = vmax.xlane.f32.xlu0 %v357
  %v548 = vpop.xlane.xlu0 %547
  %549 = vmax.xlane.f32.xlu0 %v362
  %v550 = vpop.xlane.xlu0 %549
  %551 = vmax.xlane.f32.xlu0 %v367
  %v552 = vpop.xlane.xlu0 %551
  %553 = vmax.xlane.f32.xlu0 %v372
  %v554 = vpop.xlane.xlu0 %553
  %555 = vmax.xlane.f32.xlu0 %v377
  %v556 = vpop.xlane.xlu0 %555
  %557 = vmax.xlane.f32.xlu0 %v382
  %v558 = vpop.xlane.xlu0 %557
  %559 = vmax.xlane.f32.xlu0 %v387
  %v560 = vpop.xlane.xlu0 %559
  %561 = vmax.xlane.f32.xlu0 %v392
  %v562 = vpop.xlane.xlu0 %561
  %563 = vmax.xlane.f32.xlu0 %v397
  %v564 = vpop.xlane.xlu0 %563
  %565 = vmax.xlane.f32.xlu0 %v402
  %v566 = vpop.xlane.xlu0 %565
  %567 = vmax.xlane.f32.xlu0 %v407
  %v568 = vpop.xlane.xlu0 %567
  %569 = vmax.xlane.f32.xlu0 %v412
  %v570 = vpop.xlane.xlu0 %569
  %571 = vmax.xlane.f32.xlu0 %v417
  %v572 = vpop.xlane.xlu0 %571
  %573 = vmax.xlane.f32.xlu0 %v422
  %v574 = vpop.xlane.xlu0 %573
  %575 = vmax.xlane.f32.xlu0 %v427
  %v576 = vpop.xlane.xlu0 %575
  %577 = vmax.xlane.f32.xlu0 %v432
  %v578 = vpop.xlane.xlu0 %577
  %579 = vmax.xlane.f32.xlu0 %v437
  %v580 = vpop.xlane.xlu0 %579
  %581 = vmax.xlane.f32.xlu0 %v442
  %v582 = vpop.xlane.xlu0 %581
  %583 = vmax.xlane.f32.xlu0 %v447
  %v584 = vpop.xlane.xlu0 %583
  %585 = vmax.xlane.f32.xlu0 %v452
  %v586 = vpop.xlane.xlu0 %585
  %587 = vmax.xlane.f32.xlu0 %v457
  %v588 = vpop.xlane.xlu0 %587
  %589 = vmax.xlane.f32.xlu0 %v462
  %v590 = vpop.xlane.xlu0 %589
  %591 = vmax.xlane.f32.xlu0 %v467
  %v592 = vpop.xlane.xlu0 %591
  %593 = vmax.xlane.f32.xlu0 %v472
  %v594 = vpop.xlane.xlu0 %593
  %595 = vmax.xlane.f32.xlu0 %v477
  %v596 = vpop.xlane.xlu0 %595
  %597 = vmax.xlane.f32.xlu0 %v482
  %v598 = vpop.xlane.xlu0 %597
  %599 = vmax.xlane.f32.xlu0 %v487
  %v600 = vpop.xlane.xlu0 %599
  %601 = vmax.xlane.f32.xlu0 %v492
  %v602 = vpop.xlane.xlu0 %601
  %603 = vmax.xlane.f32.xlu0 %v497
  %v604 = vpop.xlane.xlu0 %603
  %605 = vmax.xlane.f32.xlu0 %v502
  %v606 = vpop.xlane.xlu0 %605
  %607 = vmax.xlane.f32.xlu0 %v507
  %v608 = vpop.xlane.xlu0 %607
  %609 = vmax.xlane.f32.xlu0 %v512
  %v610 = vpop.xlane.xlu0 %609
  %v611 = vsub.f32 %v357, %v548
  %v612 = vsub.f32 %v362, %v550
  %v613 = vsub.f32 %v367, %v552
  %v614 = vsub.f32 %v372, %v554
  %v615 = vsub.f32 %v377, %v556
  %v616 = vsub.f32 %v382, %v558
  %v617 = vsub.f32 %v387, %v560
  %v618 = vsub.f32 %v392, %v562
  %v619 = vsub.f32 %v397, %v564
  %v620 = vsub.f32 %v402, %v566
  %v621 = vsub.f32 %v407, %v568
  %v622 = vsub.f32 %v412, %v570
  %v623 = vsub.f32 %v417, %v572
  %v624 = vsub.f32 %v422, %v574
  %v625 = vsub.f32 %v427, %v576
  %v626 = vsub.f32 %v432, %v578
  %v627 = vsub.f32 %v437, %v580
  %v628 = vsub.f32 %v442, %v582
  %v629 = vsub.f32 %v447, %v584
  %v630 = vsub.f32 %v452, %v586
  %v631 = vsub.f32 %v457, %v588
  %v632 = vsub.f32 %v462, %v590
  %v633 = vsub.f32 %v467, %v592
  %v634 = vsub.f32 %v472, %v594
  %v635 = vsub.f32 %v477, %v596
  %v636 = vsub.f32 %v482, %v598
  %v637 = vsub.f32 %v487, %v600
  %v638 = vsub.f32 %v492, %v602
  %v639 = vsub.f32 %v497, %v604
  %v640 = vsub.f32 %v502, %v606
  %v641 = vsub.f32 %v507, %v608
  %v642 = vsub.f32 %v512, %v610
  %v643 = vmul.f32 %v611, 1.442695
  %v644 = vpow.pop %v643
  %v645 = vmul.f32 %v612, 1.442695
  %v646 = vpow.pop %v645
  %v647 = vmul.f32 %v613, 1.442695
  %v648 = vpow.pop %v647
  %v649 = vmul.f32 %v614, 1.442695
  %v650 = vpow.pop %v649
  %v651 = vmul.f32 %v615, 1.442695
  %v652 = vpow.pop %v651
  %v653 = vmul.f32 %v616, 1.442695
  %v654 = vpow.pop %v653
  %v655 = vmul.f32 %v617, 1.442695
  %v656 = vpow.pop %v655
  %v657 = vmul.f32 %v618, 1.442695
  %v658 = vpow.pop %v657
  %v659 = vmul.f32 %v619, 1.442695
  %v660 = vpow.pop %v659
  %v661 = vmul.f32 %v620, 1.442695
  %v662 = vpow.pop %v661
  %v663 = vmul.f32 %v621, 1.442695
  %v664 = vpow.pop %v663
  %v665 = vmul.f32 %v622, 1.442695
  %v666 = vpow.pop %v665
  %v667 = vmul.f32 %v623, 1.442695
  %v668 = vpow.pop %v667
  %v669 = vmul.f32 %v624, 1.442695
  %v670 = vpow.pop %v669
  %v671 = vmul.f32 %v625, 1.442695
  %v672 = vpow.pop %v671
  %v673 = vmul.f32 %v626, 1.442695
  %v674 = vpow.pop %v673
  %v675 = vmul.f32 %v627, 1.442695
  %v676 = vpow.pop %v675
  %v677 = vmul.f32 %v628, 1.442695
  %v678 = vpow.pop %v677
  %v679 = vmul.f32 %v629, 1.442695
  %v680 = vpow.pop %v679
  %v681 = vmul.f32 %v630, 1.442695
  %v682 = vpow.pop %v681
  %v683 = vmul.f32 %v631, 1.442695
  %v684 = vpow.pop %v683
  %v685 = vmul.f32 %v632, 1.442695
  %v686 = vpow.pop %v685
  %v687 = vmul.f32 %v633, 1.442695
  %v688 = vpow.pop %v687
  %v689 = vmul.f32 %v634, 1.442695
  %v690 = vpow.pop %v689
  %v691 = vmul.f32 %v635, 1.442695
  %v692 = vpow.pop %v691
  %v693 = vmul.f32 %v636, 1.442695
  %v694 = vpow.pop %v693
  %v695 = vmul.f32 %v637, 1.442695
  %v696 = vpow.pop %v695
  %v697 = vmul.f32 %v638, 1.442695
  %v698 = vpow.pop %v697
  %v699 = vmul.f32 %v639, 1.442695
  %v700 = vpow.pop %v699
  %v701 = vmul.f32 %v640, 1.442695
  %v702 = vpow.pop %v701
  %v703 = vmul.f32 %v641, 1.442695
  %v704 = vpow.pop %v703
  %v705 = vmul.f32 %v642, 1.442695
  %v706 = vpow.pop %v705
  %707 = vadd.xlane.f32.xlu0 %v644
  %v708 = vpop.xlane.xlu0 %707
  %709 = vadd.xlane.f32.xlu0 %v646
  %v710 = vpop.xlane.xlu0 %709
  %711 = vadd.xlane.f32.xlu0 %v648
  %v712 = vpop.xlane.xlu0 %711
  %713 = vadd.xlane.f32.xlu0 %v650
  %v714 = vpop.xlane.xlu0 %713
  %715 = vadd.xlane.f32.xlu0 %v652
  %v716 = vpop.xlane.xlu0 %715
  %717 = vadd.xlane.f32.xlu0 %v654
  %v718 = vpop.xlane.xlu0 %717
  %719 = vadd.xlane.f32.xlu0 %v656
  %v720 = vpop.xlane.xlu0 %719
  %721 = vadd.xlane.f32.xlu0 %v658
  %v722 = vpop.xlane.xlu0 %721
  %723 = vadd.xlane.f32.xlu0 %v660
  %v724 = vpop.xlane.xlu0 %723
  %725 = vadd.xlane.f32.xlu0 %v662
  %v726 = vpop.xlane.xlu0 %725
  %727 = vadd.xlane.f32.xlu0 %v664
  %v728 = vpop.xlane.xlu0 %727
  %729 = vadd.xlane.f32.xlu0 %v666
  %v730 = vpop.xlane.xlu0 %729
  %731 = vadd.xlane.f32.xlu0 %v668
  %v732 = vpop.xlane.xlu0 %731
  %733 = vadd.xlane.f32.xlu0 %v670
  %v734 = vpop.xlane.xlu0 %733
  %735 = vadd.xlane.f32.xlu0 %v672
  %v736 = vpop.xlane.xlu0 %735
  %737 = vadd.xlane.f32.xlu0 %v674
  %v738 = vpop.xlane.xlu0 %737
  %739 = vadd.xlane.f32.xlu0 %v676
  %v740 = vpop.xlane.xlu0 %739
  %741 = vadd.xlane.f32.xlu0 %v678
  %v742 = vpop.xlane.xlu0 %741
  %743 = vadd.xlane.f32.xlu0 %v680
  %v744 = vpop.xlane.xlu0 %743
  %745 = vadd.xlane.f32.xlu0 %v682
  %v746 = vpop.xlane.xlu0 %745
  %747 = vadd.xlane.f32.xlu0 %v684
  %v748 = vpop.xlane.xlu0 %747
  %749 = vadd.xlane.f32.xlu0 %v686
  %v750 = vpop.xlane.xlu0 %749
  %751 = vadd.xlane.f32.xlu0 %v688
  %v752 = vpop.xlane.xlu0 %751
  %753 = vadd.xlane.f32.xlu0 %v690
  %v754 = vpop.xlane.xlu0 %753
  %755 = vadd.xlane.f32.xlu0 %v692
  %v756 = vpop.xlane.xlu0 %755
  %757 = vadd.xlane.f32.xlu0 %v694
  %v758 = vpop.xlane.xlu0 %757
  %759 = vadd.xlane.f32.xlu0 %v696
  %v760 = vpop.xlane.xlu0 %759
  %761 = vadd.xlane.f32.xlu0 %v698
  %v762 = vpop.xlane.xlu0 %761
  %763 = vadd.xlane.f32.xlu0 %v700
  %v764 = vpop.xlane.xlu0 %763
  %765 = vadd.xlane.f32.xlu0 %v702
  %v766 = vpop.xlane.xlu0 %765
  %767 = vadd.xlane.f32.xlu0 %v704
  %v768 = vpop.xlane.xlu0 %767
  %769 = vadd.xlane.f32.xlu0 %v706
  %v770 = vpop.xlane.xlu0 %769
  %v771 = vlog2.pop %v708
  %v772 = vmul.f32 %v771, 0.6931472
  %v773 = vlog2.pop %v710
  %v774 = vmul.f32 %v773, 0.6931472
  %v775 = vlog2.pop %v712
  %v776 = vmul.f32 %v775, 0.6931472
  %v777 = vlog2.pop %v714
  %v778 = vmul.f32 %v777, 0.6931472
  %v779 = vlog2.pop %v716
  %v780 = vmul.f32 %v779, 0.6931472
  %v781 = vlog2.pop %v718
  %v782 = vmul.f32 %v781, 0.6931472
  %v783 = vlog2.pop %v720
  %v784 = vmul.f32 %v783, 0.6931472
  %v785 = vlog2.pop %v722
  %v786 = vmul.f32 %v785, 0.6931472
  %v787 = vlog2.pop %v724
  %v788 = vmul.f32 %v787, 0.6931472
  %v789 = vlog2.pop %v726
  %v790 = vmul.f32 %v789, 0.6931472
  %v791 = vlog2.pop %v728
  %v792 = vmul.f32 %v791, 0.6931472
  %v793 = vlog2.pop %v730
  %v794 = vmul.f32 %v793, 0.6931472
  %v795 = vlog2.pop %v732
  %v796 = vmul.f32 %v795, 0.6931472
  %v797 = vlog2.pop %v734
  %v798 = vmul.f32 %v797, 0.6931472
  %v799 = vlog2.pop %v736
  %v800 = vmul.f32 %v799, 0.6931472
  %v801 = vlog2.pop %v738
  %v802 = vmul.f32 %v801, 0.6931472
  %v803 = vlog2.pop %v740
  %v804 = vmul.f32 %v803, 0.6931472
  %v805 = vlog2.pop %v742
  %v806 = vmul.f32 %v805, 0.6931472
  %v807 = vlog2.pop %v744
  %v808 = vmul.f32 %v807, 0.6931472
  %v809 = vlog2.pop %v746
  %v810 = vmul.f32 %v809, 0.6931472
  %v811 = vlog2.pop %v748
  %v812 = vmul.f32 %v811, 0.6931472
  %v813 = vlog2.pop %v750
  %v814 = vmul.f32 %v813, 0.6931472
  %v815 = vlog2.pop %v752
  %v816 = vmul.f32 %v815, 0.6931472
  %v817 = vlog2.pop %v754
  %v818 = vmul.f32 %v817, 0.6931472
  %v819 = vlog2.pop %v756
  %v820 = vmul.f32 %v819, 0.6931472
  %v821 = vlog2.pop %v758
  %v822 = vmul.f32 %v821, 0.6931472
  %v823 = vlog2.pop %v760
  %v824 = vmul.f32 %v823, 0.6931472
  %v825 = vlog2.pop %v762
  %v826 = vmul.f32 %v825, 0.6931472
  %v827 = vlog2.pop %v764
  %v828 = vmul.f32 %v827, 0.6931472
  %v829 = vlog2.pop %v766
  %v830 = vmul.f32 %v829, 0.6931472
  %v831 = vlog2.pop %v768
  %v832 = vmul.f32 %v831, 0.6931472
  %v833 = vlog2.pop %v770
  %v834 = vmul.f32 %v833, 0.6931472
  %v835 = vadd.f32 %v548, %v772
  %v836 = vadd.f32 %v550, %v774
  %v837 = vadd.f32 %v552, %v776
  %v838 = vadd.f32 %v554, %v778
  %v839 = vadd.f32 %v556, %v780
  %v840 = vadd.f32 %v558, %v782
  %v841 = vadd.f32 %v560, %v784
  %v842 = vadd.f32 %v562, %v786
  %v843 = vadd.f32 %v564, %v788
  %v844 = vadd.f32 %v566, %v790
  %v845 = vadd.f32 %v568, %v792
  %v846 = vadd.f32 %v570, %v794
  %v847 = vadd.f32 %v572, %v796
  %v848 = vadd.f32 %v574, %v798
  %v849 = vadd.f32 %v576, %v800
  %v850 = vadd.f32 %v578, %v802
  %v851 = vadd.f32 %v580, %v804
  %v852 = vadd.f32 %v582, %v806
  %v853 = vadd.f32 %v584, %v808
  %v854 = vadd.f32 %v586, %v810
  %v855 = vadd.f32 %v588, %v812
  %v856 = vadd.f32 %v590, %v814
  %v857 = vadd.f32 %v592, %v816
  %v858 = vadd.f32 %v594, %v818
  %v859 = vadd.f32 %v596, %v820
  %v860 = vadd.f32 %v598, %v822
  %v861 = vadd.f32 %v600, %v824
  %v862 = vadd.f32 %v602, %v826
  %v863 = vadd.f32 %v604, %v828
  %v864 = vadd.f32 %v606, %v830
  %v865 = vadd.f32 %v608, %v832
  %v866 = vadd.f32 %v610, %v834
  %867 = vset.pattern.permute.xlu0 0
  %868 = vperm.xlu0 %867, %v48
  %v869 = vpop.permute.xlu0 %868
  %870 = vset.pattern.permute.xlu0 0
  %871 = vperm.xlu0 %870, %v49
  %v872 = vpop.permute.xlu0 %871
  %873 = vset.pattern.permute.xlu0 0
  %874 = vperm.xlu0 %873, %v50
  %v875 = vpop.permute.xlu0 %874
  %876 = vset.pattern.permute.xlu0 0
  %877 = vperm.xlu0 %876, %v51
  %v878 = vpop.permute.xlu0 %877
  %879 = vset.pattern.permute.xlu0 0
  %880 = vperm.xlu0 %879, %v52
  %v881 = vpop.permute.xlu0 %880
  %882 = vset.pattern.permute.xlu0 0
  %883 = vperm.xlu0 %882, %v53
  %v884 = vpop.permute.xlu0 %883
  %885 = vset.pattern.permute.xlu0 0
  %886 = vperm.xlu0 %885, %v54
  %v887 = vpop.permute.xlu0 %886
  %888 = vset.pattern.permute.xlu0 0
  %889 = vperm.xlu0 %888, %v55
  %v890 = vpop.permute.xlu0 %889
  %891 = vset.pattern.permute.xlu0 0
  %892 = vperm.xlu0 %891, %v56
  %v893 = vpop.permute.xlu0 %892
  %894 = vset.pattern.permute.xlu0 0
  %895 = vperm.xlu0 %894, %v57
  %v896 = vpop.permute.xlu0 %895
  %897 = vset.pattern.permute.xlu0 0
  %898 = vperm.xlu0 %897, %v58
  %v899 = vpop.permute.xlu0 %898
  %900 = vset.pattern.permute.xlu0 0
  %901 = vperm.xlu0 %900, %v59
  %v902 = vpop.permute.xlu0 %901
  %903 = vset.pattern.permute.xlu0 0
  %904 = vperm.xlu0 %903, %v60
  %v905 = vpop.permute.xlu0 %904
  %906 = vset.pattern.permute.xlu0 0
  %907 = vperm.xlu0 %906, %v61
  %v908 = vpop.permute.xlu0 %907
  %909 = vset.pattern.permute.xlu0 0
  %910 = vperm.xlu0 %909, %v62
  %v911 = vpop.permute.xlu0 %910
  %912 = vset.pattern.permute.xlu0 0
  %913 = vperm.xlu0 %912, %v63
  %v914 = vpop.permute.xlu0 %913
  %915 = vset.pattern.permute.xlu0 0
  %916 = vperm.xlu0 %915, %v64
  %v917 = vpop.permute.xlu0 %916
  %918 = vset.pattern.permute.xlu0 0
  %919 = vperm.xlu0 %918, %v65
  %v920 = vpop.permute.xlu0 %919
  %921 = vset.pattern.permute.xlu0 0
  %922 = vperm.xlu0 %921, %v66
  %v923 = vpop.permute.xlu0 %922
  %924 = vset.pattern.permute.xlu0 0
  %925 = vperm.xlu0 %924, %v67
  %v926 = vpop.permute.xlu0 %925
  %927 = vset.pattern.permute.xlu0 0
  %928 = vperm.xlu0 %927, %v68
  %v929 = vpop.permute.xlu0 %928
  %930 = vset.pattern.permute.xlu0 0
  %931 = vperm.xlu0 %930, %v69
  %v932 = vpop.permute.xlu0 %931
  %933 = vset.pattern.permute.xlu0 0
  %934 = vperm.xlu0 %933, %v70
  %v935 = vpop.permute.xlu0 %934
  %936 = vset.pattern.permute.xlu0 0
  %937 = vperm.xlu0 %936, %v71
  %v938 = vpop.permute.xlu0 %937
  %939 = vset.pattern.permute.xlu0 0
  %940 = vperm.xlu0 %939, %v72
  %v941 = vpop.permute.xlu0 %940
  %942 = vset.pattern.permute.xlu0 0
  %943 = vperm.xlu0 %942, %v73
  %v944 = vpop.permute.xlu0 %943
  %945 = vset.pattern.permute.xlu0 0
  %946 = vperm.xlu0 %945, %v74
  %v947 = vpop.permute.xlu0 %946
  %948 = vset.pattern.permute.xlu0 0
  %949 = vperm.xlu0 %948, %v75
  %v950 = vpop.permute.xlu0 %949
  %951 = vset.pattern.permute.xlu0 0
  %952 = vperm.xlu0 %951, %v76
  %v953 = vpop.permute.xlu0 %952
  %954 = vset.pattern.permute.xlu0 0
  %955 = vperm.xlu0 %954, %v77
  %v956 = vpop.permute.xlu0 %955
  %957 = vset.pattern.permute.xlu0 0
  %958 = vperm.xlu0 %957, %v78
  %v959 = vpop.permute.xlu0 %958
  %960 = vset.pattern.permute.xlu0 0
  %961 = vperm.xlu0 %960, %v79
  %v962 = vpop.permute.xlu0 %961
  %vm963 = vcmp.eq.s32.totalorder %v81, %v869
  %vm964 = vcmp.eq.s32.totalorder %v81, %v872
  %vm965 = vcmp.eq.s32.totalorder %v81, %v875
  %vm966 = vcmp.eq.s32.totalorder %v81, %v878
  %vm967 = vcmp.eq.s32.totalorder %v81, %v881
  %vm968 = vcmp.eq.s32.totalorder %v81, %v884
  %vm969 = vcmp.eq.s32.totalorder %v81, %v887
  %vm970 = vcmp.eq.s32.totalorder %v81, %v890
  %vm971 = vcmp.eq.s32.totalorder %v81, %v893
  %vm972 = vcmp.eq.s32.totalorder %v81, %v896
  %vm973 = vcmp.eq.s32.totalorder %v81, %v899
  %vm974 = vcmp.eq.s32.totalorder %v81, %v902
  %vm975 = vcmp.eq.s32.totalorder %v81, %v905
  %vm976 = vcmp.eq.s32.totalorder %v81, %v908
  %vm977 = vcmp.eq.s32.totalorder %v81, %v911
  %vm978 = vcmp.eq.s32.totalorder %v81, %v914
  %vm979 = vcmp.eq.s32.totalorder %v81, %v917
  %vm980 = vcmp.eq.s32.totalorder %v81, %v920
  %vm981 = vcmp.eq.s32.totalorder %v81, %v923
  %vm982 = vcmp.eq.s32.totalorder %v81, %v926
  %vm983 = vcmp.eq.s32.totalorder %v81, %v929
  %vm984 = vcmp.eq.s32.totalorder %v81, %v932
  %vm985 = vcmp.eq.s32.totalorder %v81, %v935
  %vm986 = vcmp.eq.s32.totalorder %v81, %v938
  %vm987 = vcmp.eq.s32.totalorder %v81, %v941
  %vm988 = vcmp.eq.s32.totalorder %v81, %v944
  %vm989 = vcmp.eq.s32.totalorder %v81, %v947
  %vm990 = vcmp.eq.s32.totalorder %v81, %v950
  %vm991 = vcmp.eq.s32.totalorder %v81, %v953
  %vm992 = vcmp.eq.s32.totalorder %v81, %v956
  %vm993 = vcmp.eq.s32.totalorder %v81, %v959
  %vm994 = vcmp.eq.s32.totalorder %v81, %v962
  %v995 = vsel %vm963, %v357, 0.0
  %v996 = vsel %vm964, %v362, 0.0
  %v997 = vsel %vm965, %v367, 0.0
  %v998 = vsel %vm966, %v372, 0.0
  %v999 = vsel %vm967, %v377, 0.0
  %v1000 = vsel %vm968, %v382, 0.0
  %v1001 = vsel %vm969, %v387, 0.0
  %v1002 = vsel %vm970, %v392, 0.0
  %v1003 = vsel %vm971, %v397, 0.0
  %v1004 = vsel %vm972, %v402, 0.0
  %v1005 = vsel %vm973, %v407, 0.0
  %v1006 = vsel %vm974, %v412, 0.0
  %v1007 = vsel %vm975, %v417, 0.0
  %v1008 = vsel %vm976, %v422, 0.0
  %v1009 = vsel %vm977, %v427, 0.0
  %v1010 = vsel %vm978, %v432, 0.0
  %v1011 = vsel %vm979, %v437, 0.0
  %v1012 = vsel %vm980, %v442, 0.0
  %v1013 = vsel %vm981, %v447, 0.0
  %v1014 = vsel %vm982, %v452, 0.0
  %v1015 = vsel %vm983, %v457, 0.0
  %v1016 = vsel %vm984, %v462, 0.0
  %v1017 = vsel %vm985, %v467, 0.0
  %v1018 = vsel %vm986, %v472, 0.0
  %v1019 = vsel %vm987, %v477, 0.0
  %v1020 = vsel %vm988, %v482, 0.0
  %v1021 = vsel %vm989, %v487, 0.0
  %v1022 = vsel %vm990, %v492, 0.0
  %v1023 = vsel %vm991, %v497, 0.0
  %v1024 = vsel %vm992, %v502, 0.0
  %v1025 = vsel %vm993, %v507, 0.0
  %v1026 = vsel %vm994, %v512, 0.0
  %1027 = vadd.xlane.f32.xlu0 %v995
  %v1028 = vpop.xlane.xlu0 %1027
  %1029 = vadd.xlane.f32.xlu0 %v996
  %v1030 = vpop.xlane.xlu0 %1029
  %1031 = vadd.xlane.f32.xlu0 %v997
  %v1032 = vpop.xlane.xlu0 %1031
  %1033 = vadd.xlane.f32.xlu0 %v998
  %v1034 = vpop.xlane.xlu0 %1033
  %1035 = vadd.xlane.f32.xlu0 %v999
  %v1036 = vpop.xlane.xlu0 %1035
  %1037 = vadd.xlane.f32.xlu0 %v1000
  %v1038 = vpop.xlane.xlu0 %1037
  %1039 = vadd.xlane.f32.xlu0 %v1001
  %v1040 = vpop.xlane.xlu0 %1039
  %1041 = vadd.xlane.f32.xlu0 %v1002
  %v1042 = vpop.xlane.xlu0 %1041
  %1043 = vadd.xlane.f32.xlu0 %v1003
  %v1044 = vpop.xlane.xlu0 %1043
  %1045 = vadd.xlane.f32.xlu0 %v1004
  %v1046 = vpop.xlane.xlu0 %1045
  %1047 = vadd.xlane.f32.xlu0 %v1005
  %v1048 = vpop.xlane.xlu0 %1047
  %1049 = vadd.xlane.f32.xlu0 %v1006
  %v1050 = vpop.xlane.xlu0 %1049
  %1051 = vadd.xlane.f32.xlu0 %v1007
  %v1052 = vpop.xlane.xlu0 %1051
  %1053 = vadd.xlane.f32.xlu0 %v1008
  %v1054 = vpop.xlane.xlu0 %1053
  %1055 = vadd.xlane.f32.xlu0 %v1009
  %v1056 = vpop.xlane.xlu0 %1055
  %1057 = vadd.xlane.f32.xlu0 %v1010
  %v1058 = vpop.xlane.xlu0 %1057
  %1059 = vadd.xlane.f32.xlu0 %v1011
  %v1060 = vpop.xlane.xlu0 %1059
  %1061 = vadd.xlane.f32.xlu0 %v1012
  %v1062 = vpop.xlane.xlu0 %1061
  %1063 = vadd.xlane.f32.xlu0 %v1013
  %v1064 = vpop.xlane.xlu0 %1063
  %1065 = vadd.xlane.f32.xlu0 %v1014
  %v1066 = vpop.xlane.xlu0 %1065
  %1067 = vadd.xlane.f32.xlu0 %v1015
  %v1068 = vpop.xlane.xlu0 %1067
  %1069 = vadd.xlane.f32.xlu0 %v1016
  %v1070 = vpop.xlane.xlu0 %1069
  %1071 = vadd.xlane.f32.xlu0 %v1017
  %v1072 = vpop.xlane.xlu0 %1071
  %1073 = vadd.xlane.f32.xlu0 %v1018
  %v1074 = vpop.xlane.xlu0 %1073
  %1075 = vadd.xlane.f32.xlu0 %v1019
  %v1076 = vpop.xlane.xlu0 %1075
  %1077 = vadd.xlane.f32.xlu0 %v1020
  %v1078 = vpop.xlane.xlu0 %1077
  %1079 = vadd.xlane.f32.xlu0 %v1021
  %v1080 = vpop.xlane.xlu0 %1079
  %1081 = vadd.xlane.f32.xlu0 %v1022
  %v1082 = vpop.xlane.xlu0 %1081
  %1083 = vadd.xlane.f32.xlu0 %v1023
  %v1084 = vpop.xlane.xlu0 %1083
  %1085 = vadd.xlane.f32.xlu0 %v1024
  %v1086 = vpop.xlane.xlu0 %1085
  %1087 = vadd.xlane.f32.xlu0 %v1025
  %v1088 = vpop.xlane.xlu0 %1087
  %1089 = vadd.xlane.f32.xlu0 %v1026
  %v1090 = vpop.xlane.xlu0 %1089
  %s1091 = smul.u32 0, 256
  %v1092 = vlaneseq
  %v1093 = vshrl.u32 %v1092, 7
  %v1094 = vadd.s32 %v1093, 8
  %v1095 = vadd.s32 %v1093, 16
  %v1096 = vadd.s32 %v1093, 24
  %v1097 = vadd.s32 %v1093, 32
  %v1098 = vadd.s32 %v1093, 40
  %v1099 = vadd.s32 %v1093, 48
  %v1100 = vadd.s32 %v1093, 56
  %v1101 = vadd.s32 %v1093, 64
  %v1102 = vadd.s32 %v1093, 72
  %v1103 = vadd.s32 %v1093, 80
  %v1104 = vadd.s32 %v1093, 88
  %v1105 = vadd.s32 %v1093, 96
  %v1106 = vadd.s32 %v1093, 104
  %v1107 = vadd.s32 %v1093, 112
  %v1108 = vadd.s32 %v1093, 120
  %v1109 = vadd.s32 %v1093, 128
  %v1110 = vadd.s32 %v1093, 136
  %v1111 = vadd.s32 %v1093, 144
  %v1112 = vadd.s32 %v1093, 152
  %v1113 = vadd.s32 %v1093, 160
  %v1114 = vadd.s32 %v1093, 168
  %v1115 = vadd.s32 %v1093, 176
  %v1116 = vadd.s32 %v1093, 184
  %v1117 = vadd.s32 %v1093, 192
  %v1118 = vadd.s32 %v1093, 200
  %v1119 = vadd.s32 %v1093, 208
  %v1120 = vadd.s32 %v1093, 216
  %v1121 = vadd.s32 %v1093, 224
  %v1122 = vadd.s32 %v1093, 232
  %v1123 = vadd.s32 %v1093, 240
  %v1124 = vadd.s32 %v1093, 248
  %v1125 = vstv %s1091
  %v1126 = vadd.s32 %v1125, %v1093
  %v1127 = vadd.s32 %v1125, %v1094
  %v1128 = vadd.s32 %v1125, %v1095
  %v1129 = vadd.s32 %v1125, %v1096
  %v1130 = vadd.s32 %v1125, %v1097
  %v1131 = vadd.s32 %v1125, %v1098
  %v1132 = vadd.s32 %v1125, %v1099
  %v1133 = vadd.s32 %v1125, %v1100
  %v1134 = vadd.s32 %v1125, %v1101
  %v1135 = vadd.s32 %v1125, %v1102
  %v1136 = vadd.s32 %v1125, %v1103
  %v1137 = vadd.s32 %v1125, %v1104
  %v1138 = vadd.s32 %v1125, %v1105
  %v1139 = vadd.s32 %v1125, %v1106
  %v1140 = vadd.s32 %v1125, %v1107
  %v1141 = vadd.s32 %v1125, %v1108
  %v1142 = vadd.s32 %v1125, %v1109
  %v1143 = vadd.s32 %v1125, %v1110
  %v1144 = vadd.s32 %v1125, %v1111
  %v1145 = vadd.s32 %v1125, %v1112
  %v1146 = vadd.s32 %v1125, %v1113
  %v1147 = vadd.s32 %v1125, %v1114
  %v1148 = vadd.s32 %v1125, %v1115
  %v1149 = vadd.s32 %v1125, %v1116
  %v1150 = vadd.s32 %v1125, %v1117
  %v1151 = vadd.s32 %v1125, %v1118
  %v1152 = vadd.s32 %v1125, %v1119
  %v1153 = vadd.s32 %v1125, %v1120
  %v1154 = vadd.s32 %v1125, %v1121
  %v1155 = vadd.s32 %v1125, %v1122
  %v1156 = vadd.s32 %v1125, %v1123
  %v1157 = vadd.s32 %v1125, %v1124
  %vm1158 = vcmp.lt.s32.totalorder %v1126, 256
  %vm1159 = vcmp.lt.s32.totalorder %v1127, 256
  %vm1160 = vcmp.lt.s32.totalorder %v1128, 256
  %vm1161 = vcmp.lt.s32.totalorder %v1129, 256
  %vm1162 = vcmp.lt.s32.totalorder %v1130, 256
  %vm1163 = vcmp.lt.s32.totalorder %v1131, 256
  %vm1164 = vcmp.lt.s32.totalorder %v1132, 256
  %vm1165 = vcmp.lt.s32.totalorder %v1133, 256
  %vm1166 = vcmp.lt.s32.totalorder %v1134, 256
  %vm1167 = vcmp.lt.s32.totalorder %v1135, 256
  %vm1168 = vcmp.lt.s32.totalorder %v1136, 256
  %vm1169 = vcmp.lt.s32.totalorder %v1137, 256
  %vm1170 = vcmp.lt.s32.totalorder %v1138, 256
  %vm1171 = vcmp.lt.s32.totalorder %v1139, 256
  %vm1172 = vcmp.lt.s32.totalorder %v1140, 256
  %vm1173 = vcmp.lt.s32.totalorder %v1141, 256
  %vm1174 = vcmp.lt.s32.totalorder %v1142, 256
  %vm1175 = vcmp.lt.s32.totalorder %v1143, 256
  %vm1176 = vcmp.lt.s32.totalorder %v1144, 256
  %vm1177 = vcmp.lt.s32.totalorder %v1145, 256
  %vm1178 = vcmp.lt.s32.totalorder %v1146, 256
  %vm1179 = vcmp.lt.s32.totalorder %v1147, 256
  %vm1180 = vcmp.lt.s32.totalorder %v1148, 256
  %vm1181 = vcmp.lt.s32.totalorder %v1149, 256
  %vm1182 = vcmp.lt.s32.totalorder %v1150, 256
  %vm1183 = vcmp.lt.s32.totalorder %v1151, 256
  %vm1184 = vcmp.lt.s32.totalorder %v1152, 256
  %vm1185 = vcmp.lt.s32.totalorder %v1153, 256
  %vm1186 = vcmp.lt.s32.totalorder %v1154, 256
  %vm1187 = vcmp.lt.s32.totalorder %v1155, 256
  %vm1188 = vcmp.lt.s32.totalorder %v1156, 256
  %vm1189 = vcmp.lt.s32.totalorder %v1157, 256
  %v1190 = vsub.f32 %v835, %v1028
  %v1191 = vsub.f32 %v836, %v1030
  %v1192 = vsub.f32 %v837, %v1032
  %v1193 = vsub.f32 %v838, %v1034
  %v1194 = vsub.f32 %v839, %v1036
  %v1195 = vsub.f32 %v840, %v1038
  %v1196 = vsub.f32 %v841, %v1040
  %v1197 = vsub.f32 %v842, %v1042
  %v1198 = vsub.f32 %v843, %v1044
  %v1199 = vsub.f32 %v844, %v1046
  %v1200 = vsub.f32 %v845, %v1048
  %v1201 = vsub.f32 %v846, %v1050
  %v1202 = vsub.f32 %v847, %v1052
  %v1203 = vsub.f32 %v848, %v1054
  %v1204 = vsub.f32 %v849, %v1056
  %v1205 = vsub.f32 %v850, %v1058
  %v1206 = vsub.f32 %v851, %v1060
  %v1207 = vsub.f32 %v852, %v1062
  %v1208 = vsub.f32 %v853, %v1064
  %v1209 = vsub.f32 %v854, %v1066
  %v1210 = vsub.f32 %v855, %v1068
  %v1211 = vsub.f32 %v856, %v1070
  %v1212 = vsub.f32 %v857, %v1072
  %v1213 = vsub.f32 %v858, %v1074
  %v1214 = vsub.f32 %v859, %v1076
  %v1215 = vsub.f32 %v860, %v1078
  %v1216 = vsub.f32 %v861, %v1080
  %v1217 = vsub.f32 %v862, %v1082
  %v1218 = vsub.f32 %v863, %v1084
  %v1219 = vsub.f32 %v864, %v1086
  %v1220 = vsub.f32 %v865, %v1088
  %v1221 = vsub.f32 %v866, %v1090
  %v1222 = vsel %vm1158, %v1190, 0.0
  %v1223 = vsel %vm1159, %v1191, 0.0
  %v1224 = vsel %vm1160, %v1192, 0.0
  %v1225 = vsel %vm1161, %v1193, 0.0
  %v1226 = vsel %vm1162, %v1194, 0.0
  %v1227 = vsel %vm1163, %v1195, 0.0
  %v1228 = vsel %vm1164, %v1196, 0.0
  %v1229 = vsel %vm1165, %v1197, 0.0
  %v1230 = vsel %vm1166, %v1198, 0.0
  %v1231 = vsel %vm1167, %v1199, 0.0
  %v1232 = vsel %vm1168, %v1200, 0.0
  %v1233 = vsel %vm1169, %v1201, 0.0
  %v1234 = vsel %vm1170, %v1202, 0.0
  %v1235 = vsel %vm1171, %v1203, 0.0
  %v1236 = vsel %vm1172, %v1204, 0.0
  %v1237 = vsel %vm1173, %v1205, 0.0
  %v1238 = vsel %vm1174, %v1206, 0.0
  %v1239 = vsel %vm1175, %v1207, 0.0
  %v1240 = vsel %vm1176, %v1208, 0.0
  %v1241 = vsel %vm1177, %v1209, 0.0
  %v1242 = vsel %vm1178, %v1210, 0.0
  %v1243 = vsel %vm1179, %v1211, 0.0
  %v1244 = vsel %vm1180, %v1212, 0.0
  %v1245 = vsel %vm1181, %v1213, 0.0
  %v1246 = vsel %vm1182, %v1214, 0.0
  %v1247 = vsel %vm1183, %v1215, 0.0
  %v1248 = vsel %vm1184, %v1216, 0.0
  %v1249 = vsel %vm1185, %v1217, 0.0
  %v1250 = vsel %vm1186, %v1218, 0.0
  %v1251 = vsel %vm1187, %v1219, 0.0
  %v1252 = vsel %vm1188, %v1220, 0.0
  %v1253 = vsel %vm1189, %v1221, 0.0
  %v1254 = vadd.f32 %v1222, %v1223
  %v1255 = vadd.f32 %v1254, %v1224
  %v1256 = vadd.f32 %v1255, %v1225
  %v1257 = vadd.f32 %v1256, %v1226
  %v1258 = vadd.f32 %v1257, %v1227
  %v1259 = vadd.f32 %v1258, %v1228
  %v1260 = vadd.f32 %v1259, %v1229
  %v1261 = vadd.f32 %v1260, %v1230
  %v1262 = vadd.f32 %v1261, %v1231
  %v1263 = vadd.f32 %v1262, %v1232
  %v1264 = vadd.f32 %v1263, %v1233
  %v1265 = vadd.f32 %v1264, %v1234
  %v1266 = vadd.f32 %v1265, %v1235
  %v1267 = vadd.f32 %v1266, %v1236
  %v1268 = vadd.f32 %v1267, %v1237
  %v1269 = vadd.f32 %v1268, %v1238
  %v1270 = vadd.f32 %v1269, %v1239
  %v1271 = vadd.f32 %v1270, %v1240
  %v1272 = vadd.f32 %v1271, %v1241
  %v1273 = vadd.f32 %v1272, %v1242
  %v1274 = vadd.f32 %v1273, %v1243
  %v1275 = vadd.f32 %v1274, %v1244
  %v1276 = vadd.f32 %v1275, %v1245
  %v1277 = vadd.f32 %v1276, %v1246
  %v1278 = vadd.f32 %v1277, %v1247
  %v1279 = vadd.f32 %v1278, %v1248
  %v1280 = vadd.f32 %v1279, %v1249
  %v1281 = vadd.f32 %v1280, %v1250
  %v1282 = vadd.f32 %v1281, %v1251
  %v1283 = vadd.f32 %v1282, %v1252
  %v1284 = vadd.f32 %v1283, %v1253
  %v1285 = vrot.slane %v1284, 4
  %v1286 = vadd.f32 %v1284, %v1285
  %v1287 = vrot.slane %v1286, 2
  %v1288 = vadd.f32 %v1286, %v1287
  %v1289 = vrot.slane %v1288, 1
  %v1290 = vadd.f32 %v1288, %v1289
  %1291 = vst [vmem:[%s4] sm:$0x1] %v1290
  // Predicated region
  $region14: #{_bigram_forward_jit.1} parent=0 // pred_check
    _
  $region15: #{_bigram_forward_jit.1} parent=0 // pred_check_branch
    %1293 = sbr.rel (0) target = $region17
  $region16: #{_bigram_forward_jit.1} parent=0 // pred_region
    _
  $region17: #{_bigram_forward_jit.1} parent=0 // pred_fallthru
    _
  // Predicated region
  $region18: #{_bigram_forward_jit.1} parent=0 // pred_check
    _
  $region19: #{_bigram_forward_jit.1} parent=0 // pred_check_branch
    %1295 = sbr.rel (0) target = $region21
  $region20: #{_bigram_forward_jit.1} parent=0 // pred_region
    _
  $region21: #{_bigram_forward_jit.1} parent=0 // pred_fallthru
    _
  // Predicated region
  $region22: #{_bigram_forward_jit.1} parent=0 // pred_check
    _
  $region23: #{_bigram_forward_jit.1} parent=0 // pred_check_branch
    %1297 = sbr.rel (0) target = $region25
  $region24: #{_bigram_forward_jit.1} parent=0 // pred_region
    _
  $region25: #{_bigram_forward_jit.1} parent=0 // pred_fallthru
    _
  // Predicated region
  $region26: #{_bigram_forward_jit.1} parent=0 // pred_check
    _
  $region27: #{_bigram_forward_jit.1} parent=0 // pred_check_branch
    %1299 = sbr.rel (0) target = $region29
  $region28: #{_bigram_forward_jit.1} parent=0 // pred_region
    _
  $region29: #{_bigram_forward_jit.1} parent=0 // pred_fallthru
    _

</llo_original>
